<compile_context>
chip_gen: v6e
topology: v6e:2x2x1
jax: 0.10.0
libtpu: 0.0.40
codegen_flags: <defaults>
</compile_context>

<pallas_src>
import functools

import jax
import jax.numpy as jnp
import numpy as np
from jax.experimental import pallas as pl
from jax.experimental.pallas import tpu as pltpu

_EPS = 1e-6  # torch F.pairwise_distance default eps (added to the difference)


def _cdiv(a, b):
    return -(-a // b)


def _round_up(a, m):
    return _cdiv(a, m) * m


def _loss_kernel(sel_ref, pred_ref, tgt_ref, out_ref, acc_ref, *, n_valid_rows):
    """One grid step.

    Grid = (num_parts, n_inner):
      axis 0 ("parallel")  : batch split across TensorCores (v7x megacore)
      axis 1 ("arbitrary") : sequential reduction over the part's row tiles

    pred_ref/tgt_ref : (row_tile, W) input tile (lane-dense when 128 % D == 0)
    sel_ref          : (W, R) 0/1 selector; diff^2 @ sel segment-sums each
                       original row's D squared entries (R original rows / W lanes)
    out_ref          : (1, 1, 1) per-part partial sum, resident across axis 1
    acc_ref          : (row_tile, R) f32 VMEM accumulator of per-row distances
    """
    i = pl.program_id(1)
    n_inner = pl.num_programs(1)

    @pl.when(i == 0)
    def _init():
        acc_ref[...] = jnp.zeros_like(acc_ref)
        out_ref[...] = jnp.zeros_like(out_ref)

    p = jnp.exp(-pred_ref[...].astype(jnp.float32))
    t = jnp.exp(-tgt_ref[...].astype(jnp.float32))
    diff = p - t + _EPS
    sq = diff * diff

    T, R = acc_ref.shape
    if R == 1:
        # Generic path (D does not divide 128): one row per tile row.
        ssq = jnp.sum(sq, axis=-1, keepdims=True)                              # (T, 1)
    else:
        # Lane-dense path: segment-sum 128 lanes into R rows on the MXU.
        ssq = jnp.dot(sq, sel_ref[...], preferred_element_type=jnp.float32)    # (T, R)
    dist = jnp.sqrt(ssq)

    # Mask rows that only exist because of padding (they would add eps*sqrt(D)).
    step = pl.program_id(0) * n_inner + i
    sub = jax.lax.broadcasted_iota(jnp.int32, (T, R), 0)
    chk = jax.lax.broadcasted_iota(jnp.int32, (T, R), 1)
    orig_row = (step * T + sub) * R + chk
    acc_ref[...] += jnp.where(orig_row < n_valid_rows, dist, 0.0)

    # Single deferred cross-lane reduction + scalar store per part.
    @pl.when(i == n_inner - 1)
    def _finalize():
        out_ref[...] += jnp.sum(acc_ref[...])


def loss_function(pred_position, target_position, *, max_rows_per_tile=2048,
                  num_parts=None):
    assert pred_position.shape == target_position.shape
    D = int(pred_position.shape[-1])
    B = int(np.prod(pred_position.shape[:-1])) if pred_position.ndim > 1 else 1
    p = pred_position.reshape(B, D)
    t = target_position.reshape(B, D)

    # Lane-dense packing: R original rows per 128-lane row when D divides 128.
    lane_dense = (D <= 128) and (128 % D == 0)
    if lane_dense:
        R, W = 128 // D, 128
    else:
        R, W = 1, D

    rows = _cdiv(B, R)                      # packed rows of real data
    w_pad = _round_up(W, 128)               # lane-padded width in VMEM
    # Keep 2 inputs x 2 pipeline buffers x tile under ~4 MiB of scoped VMEM.
    cap = (4 * 1024 * 1024) // (16 * w_pad)
    cap = max(16, (min(int(max_rows_per_tile), cap) // 16) * 16)

    if num_parts is None:
        num_parts = 2 if rows > cap else 1  # feed both TensorCores on v7x

    rows_per_part = _cdiv(rows, num_parts)
    n_inner = max(1, _cdiv(rows_per_part, cap))
    row_tile = _round_up(_cdiv(rows_per_part, n_inner), 16)   # sublane-safe (f32/bf16)
    rows_padded = num_parts * n_inner * row_tile
    B_padded = rows_padded * R

    if B_padded != B:
        p = jnp.pad(p, ((0, B_padded - B), (0, 0)))
        t = jnp.pad(t, ((0, B_padded - B), (0, 0)))
    if lane_dense:
        p = p.reshape(rows_padded, W)       # free: row-major contiguous
        t = t.reshape(rows_padded, W)

    if lane_dense:
        sel_np = (np.arange(W)[:, None] // D == np.arange(R)[None, :])
    else:
        sel_np = np.ones((W, R))
    sel = jnp.asarray(sel_np, dtype=jnp.float32)

    kernel = functools.partial(_loss_kernel, n_valid_rows=B)

    partial_sums = pl.pallas_call(
        kernel,
        out_shape=jax.ShapeDtypeStruct((num_parts, 1, 1), jnp.float32),
        grid_spec=pltpu.PrefetchScalarGridSpec(
            num_scalar_prefetch=0,
            grid=(num_parts, n_inner),
            in_specs=[
                pl.BlockSpec((W, R), lambda p_, i: (0, 0)),          # selector (resident)
                pl.BlockSpec((row_tile, W), lambda p_, i: (p_ * n_inner + i, 0)),
                pl.BlockSpec((row_tile, W), lambda p_, i: (p_ * n_inner + i, 0)),
            ],
            out_specs=pl.BlockSpec((1, 1, 1), lambda p_, i: (p_, 0, 0)),
            scratch_shapes=[pltpu.VMEM((row_tile, R), jnp.float32)],
        ),
        compiler_params=pltpu.CompilerParams(
            dimension_semantics=("parallel", "arbitrary"),
        ),
    )(sel, p, t)
    return jnp.sum(partial_sums)


def _reference(pred, tgt):
    diff = jnp.exp(-pred.astype(jnp.float32)) - jnp.exp(-tgt.astype(jnp.float32)) + _EPS
    return jnp.sum(jnp.sqrt(jnp.sum(diff * diff, axis=-1)))


if __name__ == "__main__":
    key = jax.random.PRNGKey(0)
    k1, k2, k3, k4 = jax.random.split(key, 4)

    # 1) Primary small test: (batch=16, position_dim=32) -> lane-dense, single grid step.
    B, D = 16, 32
    pred_position = jax.random.normal(k1, (B, D), dtype=jnp.float32)
    target_position = jax.random.normal(k2, (B, D), dtype=jnp.float32)
    loss = jax.block_until_ready(loss_function(pred_position, target_position))
    ref = _reference(pred_position, target_position)
    assert jnp.allclose(loss, ref, rtol=1e-5, atol=1e-5), (loss, ref)

    # 2) Generic-D path (D=3 does not divide 128) with odd batch -> padding + masking.
    B2, D2 = 10, 3
    p2 = jax.random.normal(k3, (B2, D2), dtype=jnp.float32)
    t2 = jax.random.normal(k4, (B2, D2), dtype=jnp.float32)
    loss2 = jax.block_until_ready(loss_function(p2, t2))
    ref2 = _reference(p2, t2)
    assert jnp.allclose(loss2, ref2, rtol=1e-5, atol=1e-5), (loss2, ref2)

    # 3) Multi-step / two-part (v7x dual-TensorCore style) path, forced with a tiny tile cap.
    B3, D3 = 200, 32
    p3 = jax.random.normal(k1, (B3, D3), dtype=jnp.float32)
    t3 = jax.random.normal(k2, (B3, D3), dtype=jnp.float32)
    loss3 = jax.block_until_ready(loss_function(p3, t3, max_rows_per_tile=16))
    ref3 = _reference(p3, t3)
    assert jnp.allclose(loss3, ref3, rtol=1e-5, atol=1e-5), (loss3, ref3)

    print("KERNEL_OK")
</pallas_src>

<mosaic_0001>
module attributes {stable_mosaic.version = 11 : i64} {
  func.func @_loss_kernel(%arg0: i32, %arg1: i32, %arg2: memref<128x4xf32, #tpu.memory_space<vmem>>, %arg3: memref<16x128xf32, #tpu.memory_space<vmem>>, %arg4: memref<16x128xf32, #tpu.memory_space<vmem>>, %arg5: memref<1x1x1xf32, #tpu.memory_space<vmem>>, %arg6: memref<16x4xf32, #tpu.memory_space<vmem>>) attributes {dimension_semantics = [#tpu.dimension_semantics<parallel>, #tpu.dimension_semantics<arbitrary>], iteration_bounds = array<i64: 1, 1>, scalar_prefetch = 0 : i64, scratch_operands = 1 : i64, tpu.core_type = #tpu.core_type<tc>, window_params = [{pipeline_mode = #tpu.pipeline_mode<synchronous>, transform_indices = @transform_0, window_bounds = array<i64: 128, 4>}, {transform_indices = @transform_1, window_bounds = array<i64: 16, 128>}, {transform_indices = @transform_2, window_bounds = array<i64: 16, 128>}, {transform_indices = @transform_3, window_bounds = array<i64: 1, 1, 1>}]} {
    %c0_i32 = arith.constant 0 : i32
    %0 = arith.cmpi eq, %arg1, %c0_i32 : i32
    %1 = arith.extui %0 : i1 to i32
    %c0_i32_0 = arith.constant 0 : i32
    %2 = arith.cmpi ne, %1, %c0_i32_0 : i32
    scf.if %2 {
      %cst_17 = arith.constant 0.000000e+00 : f32
      %38 = vector.broadcast %cst_17 : f32 to vector<16x4xf32>
      %c0_18 = arith.constant 0 : index
      %c0_19 = arith.constant 0 : index
      %39 = vector.load %arg6[%c0_18, %c0_19] : memref<16x4xf32, #tpu.memory_space<vmem>>, vector<16x4xf32>
      tpu.vector_store %arg6[%c0_18, %c0_19], %38 {strides = array<i32>} : memref<16x4xf32, #tpu.memory_space<vmem>>, vector<16x4xf32>,
      %cst_20 = arith.constant 0.000000e+00 : f32
      %40 = vector.broadcast %cst_20 : f32 to vector<1x1x1xf32>
      %c0_21 = arith.constant 0 : index
      %c0_22 = arith.constant 0 : index
      %c0_23 = arith.constant 0 : index
      %41 = vector.load %arg5[%c0_21, %c0_22, %c0_23] : memref<1x1x1xf32, #tpu.memory_space<vmem>>, vector<1x1x1xf32>
      tpu.vector_store %arg5[%c0_21, %c0_22, %c0_23], %40 {strides = array<i32>} : memref<1x1x1xf32, #tpu.memory_space<vmem>>, vector<1x1x1xf32>,
    } else {
    }
    %c0 = arith.constant 0 : index
    %c0_1 = arith.constant 0 : index
    %3 = vector.load %arg3[%c0, %c0_1] : memref<16x128xf32, #tpu.memory_space<vmem>>, vector<16x128xf32>
    %cst = arith.constant 0.000000e+00 : f32
    %4 = vector.broadcast %cst : f32 to vector<16x128xf32>
    %5 = arith.subf %4, %3 : vector<16x128xf32>
    %6 = math.exp %5 : vector<16x128xf32>
    %c0_2 = arith.constant 0 : index
    %c0_3 = arith.constant 0 : index
    %7 = vector.load %arg4[%c0_2, %c0_3] : memref<16x128xf32, #tpu.memory_space<vmem>>, vector<16x128xf32>
    %cst_4 = arith.constant 0.000000e+00 : f32
    %8 = vector.broadcast %cst_4 : f32 to vector<16x128xf32>
    %9 = arith.subf %8, %7 : vector<16x128xf32>
    %10 = math.exp %9 : vector<16x128xf32>
    %11 = arith.subf %6, %10 : vector<16x128xf32>
    %cst_5 = arith.constant 9.99999997E-7 : f32
    %12 = vector.broadcast %cst_5 : f32 to vector<16x128xf32>
    %13 = arith.addf %11, %12 : vector<16x128xf32>
    %14 = arith.mulf %13, %13 : vector<16x128xf32>
    %c0_6 = arith.constant 0 : index
    %c0_7 = arith.constant 0 : index
    %15 = vector.load %arg2[%c0_6, %c0_7] : memref<128x4xf32, #tpu.memory_space<vmem>>, vector<128x4xf32>
    %cst_8 = arith.constant dense<0.000000e+00> : vector<16x4xf32>
    %16 = tpu.matmul %14, %15, %cst_8 {dimension_numbers = #tpu.dot_dimension_numbers<[1], [0], [0], [1], [0, 0, 1, 1], [], []>} : vector<16x128xf32>, vector<128x4xf32>, vector<16x4xf32> -> vector<16x4xf32>
    %17 = math.sqrt %16 : vector<16x4xf32>
    %c1_i32 = arith.constant 1 : i32
    %18 = arith.muli %arg0, %c1_i32 : i32
    %19 = arith.addi %18, %arg1 : i32
    %20 = tpu.iota {dimensions = array<i32: 0>} : vector<16x4xi32>
    %21 = tpu.iota {dimensions = array<i32: 1>} : vector<16x4xi32>
    %c16_i32 = arith.constant 16 : i32
    %22 = arith.muli %19, %c16_i32 : i32
    %23 = vector.broadcast %22 : i32 to vector<16x4xi32>
    %24 = arith.addi %23, %20 : vector<16x4xi32>
    %c4_i32 = arith.constant 4 : i32
    %25 = vector.broadcast %c4_i32 : i32 to vector<16x4xi32>
    %26 = arith.muli %24, %25 : vector<16x4xi32>
    %27 = arith.addi %26, %21 : vector<16x4xi32>
    %c0_9 = arith.constant 0 : index
    %c0_10 = arith.constant 0 : index
    %28 = vector.load %arg6[%c0_9, %c0_10] : memref<16x4xf32, #tpu.memory_space<vmem>>, vector<16x4xf32>
    %c16_i32_11 = arith.constant 16 : i32
    %29 = vector.broadcast %c16_i32_11 : i32 to vector<16x4xi32>
    %30 = arith.cmpi slt, %27, %29 : vector<16x4xi32>
    %cst_12 = arith.constant 0.000000e+00 : f32
    %31 = vector.broadcast %cst_12 : f32 to vector<16x4xf32>
    %32 = arith.select %30, %17, %31 : vector<16x4xi1>, vector<16x4xf32>
    %33 = arith.addf %28, %32 : vector<16x4xf32>
    %c0_13 = arith.constant 0 : index
    %c0_14 = arith.constant 0 : index
    %34 = vector.load %arg6[%c0_13, %c0_14] : memref<16x4xf32, #tpu.memory_space<vmem>>, vector<16x4xf32>
    tpu.vector_store %arg6[%c0_13, %c0_14], %33 {strides = array<i32>} : memref<16x4xf32, #tpu.memory_space<vmem>>, vector<16x4xf32>,
    %c0_i32_15 = arith.constant 0 : i32
    %35 = arith.cmpi eq, %arg1, %c0_i32_15 : i32
    %36 = arith.extui %35 : i1 to i32
    %c0_i32_16 = arith.constant 0 : i32
    %37 = arith.cmpi ne, %36, %c0_i32_16 : i32
    scf.if %37 {
      %c0_17 = arith.constant 0 : index
      %c0_18 = arith.constant 0 : index
      %c0_19 = arith.constant 0 : index
      %38 = vector.load %arg5[%c0_17, %c0_18, %c0_19] : memref<1x1x1xf32, #tpu.memory_space<vmem>>, vector<1x1x1xf32>
      %c0_20 = arith.constant 0 : index
      %c0_21 = arith.constant 0 : index
      %39 = vector.load %arg6[%c0_20, %c0_21] : memref<16x4xf32, #tpu.memory_space<vmem>>, vector<16x4xf32>
      %40 = vector.shape_cast %39 : vector<16x4xf32> to vector<1x16x4xf32>
      %cst_22 = arith.constant dense<0.000000e+00> : vector<1xf32>
      %41 = vector.multi_reduction <add>, %40, %cst_22 [1, 2] : vector<1x16x4xf32> to vector<1xf32>
      %42 = vector.shape_cast %41 : vector<1xf32> to vector<1x1x1xf32>
      %43 = vector.extract %42[0, 0, 0] : f32 from vector<1x1x1xf32>
      %44 = vector.broadcast %43 : f32 to vector<1x1x1xf32>
      %45 = arith.addf %38, %44 : vector<1x1x1xf32>
      %c0_23 = arith.constant 0 : index
      %c0_24 = arith.constant 0 : index
      %c0_25 = arith.constant 0 : index
      %46 = vector.load %arg5[%c0_23, %c0_24, %c0_25] : memref<1x1x1xf32, #tpu.memory_space<vmem>>, vector<1x1x1xf32>
      tpu.vector_store %arg5[%c0_23, %c0_24, %c0_25], %45 {strides = array<i32>} : memref<1x1x1xf32, #tpu.memory_space<vmem>>, vector<1x1x1xf32>,
    } else {
    }
    return
  }
  func.func @transform_0(%arg0: i32, %arg1: i32) -> (i32, i32) {
    %c0_i32 = arith.constant 0 : i32
    %c0_i32_0 = arith.constant 0 : i32
    %c0_i32_1 = arith.constant 0 : i32
    return %c0_i32, %c0_i32_0 : i32, i32
  }
  func.func @transform_1(%arg0: i32, %arg1: i32) -> (i32, i32) {
    %c1_i32 = arith.constant 1 : i32
    %0 = arith.muli %arg0, %c1_i32 : i32
    %1 = arith.addi %0, %arg1 : i32
    %c0_i32 = arith.constant 0 : i32
    %c0_i32_0 = arith.constant 0 : i32
    return %1, %c0_i32 : i32, i32
  }
  func.func @transform_2(%arg0: i32, %arg1: i32) -> (i32, i32) {
    %c1_i32 = arith.constant 1 : i32
    %0 = arith.muli %arg0, %c1_i32 : i32
    %1 = arith.addi %0, %arg1 : i32
    %c0_i32 = arith.constant 0 : i32
    %c0_i32_0 = arith.constant 0 : i32
    return %1, %c0_i32 : i32, i32
  }
  func.func @transform_3(%arg0: i32, %arg1: i32) -> (i32, i32, i32) {
    %c0_i32 = arith.constant 0 : i32
    %c0_i32_0 = arith.constant 0 : i32
    %c0_i32_1 = arith.constant 0 : i32
    return %arg0, %c0_i32, %c0_i32_0 : i32, i32, i32
  }
}

</mosaic_0001>

<llo_original>
// kernel: tpu_custom_call.1
$region0: #{tpu_custom_call.1}
  #allocation0 [shape = 'u32[]', space=smem, size = 0x4, offset = 0x4, fixed_abs, tag = 'smem constant byte address 0x4 - core index']
  #allocation1 [shape = 'u32[144,128]{1,0:T(1,128)}', space=vmem, size = 0x12000, scoped, tag = 'internal scratch']
  #allocation2 [shape = 'f32[16,4]{1,0:T(8,128)}', space=vmem, size = 0x2000, scoped, tag = 'scratch operand']
  %s0 = inlined_call_operand.vmem [shape: f32[128,4], index: 0, kind: input, shape index: {}]
  %s1 = inlined_call_operand.vmem [shape: f32[16,128], index: 1, kind: input, shape index: {}]
  %s2 = inlined_call_operand.vmem [shape: f32[16,128], index: 2, kind: input, shape index: {}]
  %s3 = inlined_call_operand.hbm [shape: f32[1,1,1], index: 3, kind: output, shape index: {}]
  %s4 = sld [smem:[#allocation0]]
  $region30: #{tpu_custom_call.1} parent=0
    _
  %s6 = ssub.s32 1, %s4
  %s7 = scalar_select 0, %s6, %s4
  $region1: #{tpu_custom_call.1} parent=0
    #allocation3 [shape = 'u8[512]{0}', space=vmem, size = 0x400, scoped, tag = 'output window, operand 0, single buffered']
    #allocation4 [shape = 's32[1]{0}', space=sflag, size = 0x4, scoped, tag = 'scoped memory for tpu_custom_call.1']
    %8 = vsyncpa [#allocation4], 0
    // Predicated region
    $region2: #{tpu_custom_call.1} parent=1 // pred_check
      _
    $region3: #{tpu_custom_call.1} parent=1 // pred_check_branch
      %10 = sbr.rel (0) target = $region5
    $region4: #{tpu_custom_call.1} parent=1 // pred_region
      _
    $region5: #{tpu_custom_call.1} parent=1 // pred_fallthru
      _
    // Predicated region
    $region6: #{tpu_custom_call.1} parent=1 // pred_check
      _
    $region7: #{tpu_custom_call.1} parent=1 // pred_check_branch
      %12 = sbr.rel (0) target = $region9
    $region8: #{tpu_custom_call.1} parent=1 // pred_region
      %s13 = sadd.s32 0, 0
      %s14 = smul.u32 2, %s13
      %p15 = scmp.lt.s32.totalorder %s14, 1
      %s16 = scalar_select %p15, %s14, 1
      %s17 = smul.addr %s16, 8
      %s18 = scalar_lea.vmem %s1, %s17
      %s19 = sadd.s32 0, 0
      %s20 = smul.u32 2, %s19
    $region9: #{tpu_custom_call.1} parent=1 // pred_fallthru
      _
    // Predicated region
    $region10: #{tpu_custom_call.1} parent=1 // pred_check
      _
    $region11: #{tpu_custom_call.1} parent=1 // pred_check_branch
      %22 = sbr.rel (0) target = $region13
    $region12: #{tpu_custom_call.1} parent=1 // pred_region
      %s23 = sadd.s32 0, 0
      %s24 = smul.u32 2, %s23
      %p25 = scmp.lt.s32.totalorder %s24, 1
      %s26 = scalar_select %p25, %s24, 1
      %s27 = smul.addr %s26, 8
      %s28 = scalar_lea.vmem %s2, %s27
      %s29 = sadd.s32 0, 0
      %s30 = smul.u32 2, %s29
    $region13: #{tpu_custom_call.1} parent=1 // pred_fallthru
      _
    %s31 = sadd.s32 0, 0
    %s32 = smul.u32 2, %s31
    %p33 = scmp.lt.s32.totalorder %s32, 1
    %s34 = scalar_select %p33, %s32, 1
    %s35 = smul.addr %s34, 8
    %s36 = scalar_lea.vmem %s1, %s35
    %s37 = sadd.s32 0, 0
    %s38 = smul.u32 2, %s37
    %p39 = scmp.lt.s32.totalorder %s38, 1
    %s40 = scalar_select %p39, %s38, 1
    %s41 = smul.addr %s40, 8
    %s42 = scalar_lea.vmem %s2, %s41
    %s43 = sadd.s32 0, 0
    %s44 = smul.u32 2, %s43
    %p45 = scmp.lt.s32.totalorder %s44, 1
    %s46 = scalar_select %p45, %s44, 1
    %s47 = smul.addr %s46, 8
    %s48 = scalar_lea.vmem %s1, %s47
    %s49 = sadd.s32 0, 0
    %s50 = smul.u32 2, %s49
    %s51 = sadd.s32 0, 0
    %s52 = smul.u32 2, %s51
    %p53 = scmp.lt.s32.totalorder %s52, 1
    %s54 = scalar_select %p53, %s52, 1
    %s55 = smul.addr %s54, 8
    %s56 = scalar_lea.vmem %s2, %s55
    %s57 = sadd.s32 0, 0
    %s58 = smul.u32 2, %s57
    %p59 = scmp.eq.s32.totalorder 0, 0
    // Predicated region
    $region14: #{tpu_custom_call.1} parent=1 // pred_check
      %p60 = pneg %p59
    $region15: #{tpu_custom_call.1} parent=1 // pred_check_branch
      %62 = sbr.rel (%p60) target = $region17
    $region16: #{tpu_custom_call.1} parent=1 // pred_region
      %vm63 = vcmask 31744
      %64 = vst.msk [vmem:[#allocation2] sm:$0xff] %vm63, 0.0
      %65 = vst.msk [vmem:[#allocation2 + $0x8] sm:$0xff] %vm63, 0.0
      %vm66 = vcmask 0
      %67 = vst.msk [vmem:[#allocation3] sm:$0x1] %vm66, 0.0
    $region17: #{tpu_custom_call.1} parent=1 // pred_fallthru
      _
    %v68 = vld [vmem:[%s48] sm:$0xff]
    %v69 = vld [vmem:[%s48 + $0x8] sm:$0xff]
    %v70 = vsub.f32 0.0, %v68
    %v71 = vsub.f32 0.0, %v69
    %v72 = vmul.f32 %v70, 1.442695
    %v73 = vpow.pop %v72
    %v74 = vmul.f32 %v71, 1.442695
    %v75 = vpow.pop %v74
    %v76 = vld [vmem:[%s56] sm:$0xff]
    %v77 = vld [vmem:[%s56 + $0x8] sm:$0xff]
    %v78 = vsub.f32 0.0, %v76
    %v79 = vsub.f32 0.0, %v77
    %v80 = vmul.f32 %v78, 1.442695
    %v81 = vpow.pop %v80
    %v82 = vmul.f32 %v79, 1.442695
    %v83 = vpow.pop %v82
    %v84 = vsub.f32 %v73, %v81
    %v85 = vsub.f32 %v75, %v83
    %v86 = vadd.f32 %v84, 1e-06
    %v87 = vadd.f32 %v85, 1e-06
    %v88 = vmul.f32 %v86, %v86
    %v89 = vmul.f32 %v87, %v87
    %v90 = vld [vmem:[%s0] sm:$0xff]
    %v91 = vld [vmem:[%s0 + $0x8] sm:$0xff]
    %v92 = vld [vmem:[%s0 + $0x10] sm:$0xff]
    %v93 = vld [vmem:[%s0 + $0x18] sm:$0xff]
    %v94 = vld [vmem:[%s0 + $0x20] sm:$0xff]
    %v95 = vld [vmem:[%s0 + $0x28] sm:$0xff]
    %v96 = vld [vmem:[%s0 + $0x30] sm:$0xff]
    %v97 = vld [vmem:[%s0 + $0x38] sm:$0xff]
    %v98 = vld [vmem:[%s0 + $0x40] sm:$0xff]
    %v99 = vld [vmem:[%s0 + $0x48] sm:$0xff]
    %v100 = vld [vmem:[%s0 + $0x50] sm:$0xff]
    %v101 = vld [vmem:[%s0 + $0x58] sm:$0xff]
    %v102 = vld [vmem:[%s0 + $0x60] sm:$0xff]
    %v103 = vld [vmem:[%s0 + $0x68] sm:$0xff]
    %v104 = vld [vmem:[%s0 + $0x70] sm:$0xff]
    %v105 = vld [vmem:[%s0 + $0x78] sm:$0xff]
    %106 = vmatprep.subr.mxu0 0.0
    %107 = vmatpush1.msra.mxu0 %v105
    %108 = vmatprep.subr.mxu0 0.0
    %109 = vmatpush1.msra.mxu0 %v104
    %110 = vmatprep.subr.mxu0 0.0
    %111 = vmatpush1.msra.mxu0 %v103
    %112 = vmatprep.subr.mxu0 0.0
    %113 = vmatpush1.msra.mxu0 %v102
    %114 = vmatprep.subr.mxu0 0.0
    %115 = vmatpush1.msra.mxu0 %v101
    %116 = vmatprep.subr.mxu0 0.0
    %117 = vmatpush1.msra.mxu0 %v100
    %118 = vmatprep.subr.mxu0 0.0
    %119 = vmatpush1.msra.mxu0 %v99
    %120 = vmatprep.subr.mxu0 0.0
    %121 = vmatpush1.msra.mxu0 %v98
    %122 = vmatprep.subr.mxu0 0.0
    %123 = vmatpush1.msra.mxu0 %v97
    %124 = vmatprep.subr.mxu0 0.0
    %125 = vmatpush1.msra.mxu0 %v96
    %126 = vmatprep.subr.mxu0 0.0
    %127 = vmatpush1.msra.mxu0 %v95
    %128 = vmatprep.subr.mxu0 0.0
    %129 = vmatpush1.msra.mxu0 %v94
    %130 = vmatprep.subr.mxu0 0.0
    %131 = vmatpush1.msra.mxu0 %v93
    %132 = vmatprep.subr.mxu0 0.0
    %133 = vmatpush1.msra.mxu0 %v92
    %134 = vmatprep.subr.mxu0 0.0
    %135 = vmatpush1.msra.mxu0 %v91
    %136 = vmatprep.subr.mxu0 0.0
    %137 = vmatpush1.msra.mxu0 %v90
    %138 = vmatprep.subr.mxu0 0.0
    %139 = vmatpush2.msra.mxu0 0.0
    %140 = vmatprep.subr.mxu0 0.0
    %141 = vmatpush2.msra.mxu0 0.0
    %142 = vmatprep.subr.mxu0 0.0
    %143 = vmatpush2.msra.mxu0 0.0
    %144 = vmatprep.subr.mxu0 0.0
    %145 = vmatpush2.msra.mxu0 0.0
    %146 = vmatprep.subr.mxu0 0.0
    %147 = vmatpush2.msra.mxu0 0.0
    %148 = vmatprep.subr.mxu0 0.0
    %149 = vmatpush2.msra.mxu0 0.0
    %150 = vmatprep.subr.mxu0 0.0
    %151 = vmatpush2.msra.mxu0 0.0
    %152 = vmatprep.subr.mxu0 0.0
    %153 = vmatpush2.msra.mxu0 0.0
    %154 = vmatprep.subr.mxu0 0.0
    %155 = vmatpush2.msra.mxu0 0.0
    %156 = vmatprep.subr.mxu0 0.0
    %157 = vmatpush2.msra.mxu0 0.0
    %158 = vmatprep.subr.mxu0 0.0
    %159 = vmatpush2.msra.mxu0 0.0
    %160 = vmatprep.subr.mxu0 0.0
    %161 = vmatpush2.msra.mxu0 0.0
    %162 = vmatprep.subr.mxu0 0.0
    %163 = vmatpush2.msra.mxu0 0.0
    %164 = vmatprep.subr.mxu0 0.0
    %165 = vmatpush2.msra.mxu0 0.0
    %166 = vmatprep.subr.mxu0 0.0
    %167 = vmatpush2.msra.mxu0 0.0
    %168 = vmatprep.subr.mxu0 0.0
    %169 = vmatpush2.msra.mxu0 0.0
    %170 = vmatprep.mubr.f32.mxu0 0.0
    %171 = vmatmul.mubr.f32.gmra.mxu0 %v88
    %v172 = vpop.f32.mrf.mxu0
    %v173 = vadd.f32 0.0, %v172
    %v174 = vpop.f32.mrf.mxu0
    %175 = vmatprep.mubr.f32.mxu0 0.0
    %176 = vmatmul.mubr.f32.gmra.mxu0 %v89
    %v177 = vpop.f32.mrf.mxu0
    %v178 = vadd.f32 0.0, %v177
    %v179 = vpop.f32.mrf.mxu0
    %180 = vdwg.mxu0
    %v181 = vrsqrt.pop %v173
    %v182 = vmul.f32 %v173, %v181
    %vm183 = vcmp.eq.f32.partialorder %v173, inf
    %v184 = vsel %vm183, %v173, %v182
    %vm185 = vcmp.eq.f32.partialorder %v173, 0.0
    %v186 = vand.u32 %v173, 2147483648
    %v187 = vsel %vm185, %v186, %v184
    %v188 = vrsqrt.pop %v178
    %v189 = vmul.f32 %v178, %v188
    %vm190 = vcmp.eq.f32.partialorder %v178, inf
    %v191 = vsel %vm190, %v178, %v189
    %vm192 = vcmp.eq.f32.partialorder %v178, 0.0
    %v193 = vand.u32 %v178, 2147483648
    %v194 = vsel %vm192, %v193, %v191
    %s195 = sadd.s32 0, 0
    %v196 = vlaneseq
    %v197 = vshrl.u32 %v196, 7
    %v198 = vadd.s32 %v197, 8
    %v199 = vlaneseq
    %v200 = vand.u32 %v199, 127
    %s201 = smul.u32 %s195, 16
    %v202 = vstv %s201
    %v203 = vadd.s32 %v202, %v197
    %v204 = vadd.s32 %v202, %v198
    %v205 = vmul.u32 %v203, 4
    %v206 = vmul.u32 %v204, 4
    %v207 = vadd.s32 %v205, %v200
    %v208 = vadd.s32 %v206, %v200
    %v209 = vld [vmem:[#allocation2] sm:$0xff]
    %v210 = vld [vmem:[#allocation2 + $0x8] sm:$0xff]
    %vm211 = vcmp.lt.s32.totalorder %v207, 16
    %vm212 = vcmp.lt.s32.totalorder %v208, 16
    %v213 = vsel %vm211, %v187, 0.0
    %v214 = vsel %vm212, %v194, 0.0
    %v215 = vadd.f32 %v209, %v213
    %v216 = vadd.f32 %v210, %v214
    %vm217 = vcmask 31744
    %218 = vst.msk [vmem:[#allocation2] sm:$0xff] %vm217, %v215
    %219 = vst.msk [vmem:[#allocation2 + $0x8] sm:$0xff] %vm217, %v216
    // Predicated region
    $region18: #{tpu_custom_call.1} parent=1 // pred_check
      %p220 = pneg %p59
    $region19: #{tpu_custom_call.1} parent=1 // pred_check_branch
      %222 = sbr.rel (%p220) target = $region21
    $region20: #{tpu_custom_call.1} parent=1 // pred_region
      %v223 = vld [vmem:[#allocation3] sm:$0x1]
      %v224 = vld [vmem:[#allocation2] sm:$0xff]
      %v225 = vld [vmem:[#allocation2 + $0x8] sm:$0xff]
      %v226 = vsel %vm217, %v224, 0.0
      %v227 = vsel %vm217, %v225, 0.0
      %v228 = vadd.f32 %v226, %v227
      %229 = vadd.xlane.f32.xlu0 %v228
      %v230 = vpop.xlane.xlu0 %229
      %v231 = vrot.slane %v230, 4
      %v232 = vadd.f32 %v230, %v231
      %v233 = vrot.slane %v232, 2
      %v234 = vadd.f32 %v232, %v233
      %v235 = vrot.slane %v234, 1
      %v236 = vadd.f32 %v234, %v235
      %s237 = vtos %v236
      %v238 = vstv %s237
      %v239 = vadd.f32 %v223, %v238
      %vm240 = vcmask 0
      %241 = vst.msk [vmem:[#allocation3] sm:$0x1] %vm240, %v239
    $region21: #{tpu_custom_call.1} parent=1 // pred_fallthru
      _
    // Predicated region
    $region22: #{tpu_custom_call.1} parent=1 // pred_check
      _
    $region23: #{tpu_custom_call.1} parent=1 // pred_check_branch
      %243 = sbr.rel (0) target = $region25
    $region24: #{tpu_custom_call.1} parent=1 // pred_region
      %s245 = ssub.s32 16, 16
      %246 = vsyncadd [#allocation4], %s245
      %s248 = sshll.u32 [#allocation3], 4
      %s249 = int_to_ptr.vmem [resolvable:$true] %s248
      %251 = dma.vmem_to_hbm [thread:$0]  %s249, 16, %s3, [#allocation4]
    $region25: #{tpu_custom_call.1} parent=1 // pred_fallthru
      _
    // Predicated region
    $region26: #{tpu_custom_call.1} parent=1 // pred_check
      _
    $region27: #{tpu_custom_call.1} parent=1 // pred_check_branch
      %253 = sbr.rel (0) target = $region29
    $region28: #{tpu_custom_call.1} parent=1 // pred_region
      %254 = dma.done [#allocation4], 16
    $region29: #{tpu_custom_call.1} parent=1 // pred_fallthru
      _
    %255 = vsyncpa [#allocation4], 1

</llo_original>
